<compile_context>
chip_gen: v5e
topology: v5e:2x2
jax: 0.10.0
libtpu: 0.0.40
codegen_flags: <defaults>
</compile_context>

<pallas_src>
import jax
import jax.numpy as jnp
from jax.experimental import pallas as pl
from jax.experimental.pallas import tpu as pltpu


def _dynamic_task_loss_kernel(loss_ref, lv_ref, out_ref):
    # loss_ref: (1, T) f32 in VMEM  (per-task scalar losses)
    # lv_ref:   (1, T) f32 in VMEM  (learned log-variances)
    # out_ref:  (1,)   f32 in SMEM  (scalar result)
    loss = loss_ref[...]                      # (1, T)
    lv = lv_ref[...]                          # (1, T)
    precision = jnp.exp(-lv)                  # single EUP transcendental
    weighted = precision * loss + 0.5 * lv    # VPU elementwise
    out_ref[0] = jnp.sum(weighted)            # XLU reduce -> scalar store to SMEM


def dynamic_task_loss(losses: jax.Array, log_vars: jax.Array) -> jax.Array:
    """losses: (num_tasks,) scalar task losses; log_vars: (num_tasks,) learned params."""
    assert losses.shape == log_vars.shape, (
        f"Expected {log_vars.shape[0]} losses, got {losses.shape[0]}"
    )
    num_tasks = losses.shape[0]

    # Two separate (1, T) VMEM inputs: no wrapper-side concatenate, no in-kernel
    # sublane shuffle. Reshape to 2-D so the task axis is lane-major.
    losses_2d = losses.astype(jnp.float32).reshape(1, num_tasks)
    log_vars_2d = log_vars.astype(jnp.float32).reshape(1, num_tasks)

    out = pl.pallas_call(
        _dynamic_task_loss_kernel,
        out_shape=jax.ShapeDtypeStruct((1,), jnp.float32),
        in_specs=[
            pl.BlockSpec(memory_space=pltpu.MemorySpace.VMEM),
            pl.BlockSpec(memory_space=pltpu.MemorySpace.VMEM),
        ],
        out_specs=pl.BlockSpec(memory_space=pltpu.MemorySpace.SMEM),
        cost_estimate=pl.CostEstimate(
            flops=3 * num_tasks,
            transcendentals=num_tasks,
            bytes_accessed=2 * num_tasks * 4 + 4,
        ),
    )(losses_2d, log_vars_2d)
    return out[0]


if __name__ == "__main__":
    num_tasks = 3
    key = jax.random.PRNGKey(0)
    k_loss, k_lv = jax.random.split(key)

    # Deterministic "parameter" init. nn.Parameter(torch.zeros(num_tasks)) would be all
    # zeros; perturb deterministically so the exp(-log_var) path is actually exercised.
    log_vars = 0.1 * jax.random.normal(k_lv, (num_tasks,), dtype=jnp.float32)

    # Example per-task scalar losses (e.g. outputs of three task heads).
    losses = jnp.abs(jax.random.normal(k_loss, (num_tasks,), dtype=jnp.float32)) + 0.5

    result = dynamic_task_loss(losses, log_vars)
    result = jax.block_until_ready(result)

    # Pure-JAX reference for correctness.
    precision = jnp.exp(-log_vars)
    ref = jnp.sum(precision * losses + 0.5 * log_vars)
    assert jnp.allclose(result, ref, rtol=1e-6, atol=1e-6), (result, ref)

    print("KERNEL_OK")
</pallas_src>

<mosaic_0001>
module attributes {stable_mosaic.version = 11 : i64} {
  func.func @_dynamic_task_loss_kernel(%arg0: memref<1x3xf32, #tpu.memory_space<vmem>>, %arg1: memref<1x3xf32, #tpu.memory_space<vmem>>, %arg2: memref<1xf32, #tpu.memory_space<smem>>) attributes {dimension_semantics = [], scalar_prefetch = 0 : i64, scratch_operands = 0 : i64, tpu.core_type = #tpu.core_type<tc>} {
    %c0 = arith.constant 0 : index
    %c0_0 = arith.constant 0 : index
    %0 = vector.load %arg0[%c0, %c0_0] : memref<1x3xf32, #tpu.memory_space<vmem>>, vector<1x3xf32>
    %c0_1 = arith.constant 0 : index
    %c0_2 = arith.constant 0 : index
    %1 = vector.load %arg1[%c0_1, %c0_2] : memref<1x3xf32, #tpu.memory_space<vmem>>, vector<1x3xf32>
    %cst = arith.constant 0.000000e+00 : f32
    %2 = vector.broadcast %cst : f32 to vector<1x3xf32>
    %3 = arith.subf %2, %1 : vector<1x3xf32>
    %4 = math.exp %3 : vector<1x3xf32>
    %5 = arith.mulf %4, %0 : vector<1x3xf32>
    %cst_3 = arith.constant 5.000000e-01 : f32
    %6 = vector.broadcast %cst_3 : f32 to vector<1x3xf32>
    %7 = arith.mulf %6, %1 : vector<1x3xf32>
    %8 = arith.addf %5, %7 : vector<1x3xf32>
    %9 = vector.shape_cast %8 : vector<1x3xf32> to vector<1x1x3xf32>
    %cst_4 = arith.constant dense<0.000000e+00> : vector<1xf32>
    %10 = vector.multi_reduction <add>, %9, %cst_4 [1, 2] : vector<1x1x3xf32> to vector<1xf32>
    %11 = vector.shape_cast %10 : vector<1xf32> to vector<1x1x1xf32>
    %12 = vector.extract %11[0, 0, 0] : f32 from vector<1x1x1xf32>
    %c0_5 = arith.constant 0 : index
    %13 = memref.load %arg2[%c0_5] : memref<1xf32, #tpu.memory_space<smem>>
    memref.store %12, %arg2[%c0_5] : memref<1xf32, #tpu.memory_space<smem>>
    return
  }
}

</mosaic_0001>

<llo_original>
// kernel: tpu_custom_call.1
$region0: #{tpu_custom_call.1}
  #allocation0 [shape = 'u32[]', space=smem, size = 0x4, offset = 0x4, fixed_abs, tag = 'smem constant byte address 0x4 - core index']
  #allocation1 [shape = 'u32[72,128]{1,0:T(1,128)}', space=vmem, size = 0x9000, scoped, tag = 'internal scratch']
  %s0 = inlined_call_operand.hbm [shape: f32[1,3], index: 0, kind: input, shape index: {}]
  %s1 = inlined_call_operand.hbm [shape: f32[1,3], index: 1, kind: input, shape index: {}]
  %s2 = inlined_call_operand.hbm [shape: f32[1], index: 2, kind: output, shape index: {}]
  %s3 = sld [smem:[#allocation0]]
  $region26: #{tpu_custom_call.1} parent=0
    _
  %s5 = ssub.s32 1, %s3
  %s6 = scalar_select 0, %s5, %s3
  $region1: #{tpu_custom_call.1} parent=0
    #allocation2 [shape = 'u8[512]{0}', space=vmem, size = 0x400, scoped, tag = 'input window, operand 0, single buffered']
    #allocation3 [shape = 's32[1]{0}', space=sflag, size = 0x4, scoped, tag = 'scoped memory for tpu_custom_call.1']
    #allocation4 [shape = 's32[1]{0}', space=sflag, size = 0x4, scoped, tag = 'scoped memory for tpu_custom_call.1']
    #allocation5 [shape = 'u8[512]{0}', space=vmem, size = 0x400, scoped, tag = 'input window, operand 1, single buffered']
    #allocation6 [shape = 's32[1]{0}', space=sflag, size = 0x4, scoped, tag = 'scoped memory for tpu_custom_call.1']
    #allocation7 [shape = 'u8[512]{0}', space=smem, size = 0x200, scoped, tag = 'output window, operand 0, single buffered']
    %7 = vsyncpa [#allocation3], 0
    %8 = vsyncpa [#allocation6], 0
    %9 = vsyncpa [#allocation4], 0
    // Predicated region
    $region2: #{tpu_custom_call.1} parent=1 // pred_check
      _
    $region3: #{tpu_custom_call.1} parent=1 // pred_check_branch
      %11 = sbr.rel (0) target = $region5
    $region4: #{tpu_custom_call.1} parent=1 // pred_region
      %13 = vsyncadd [#allocation3], 0
      %s15 = sshll.u32 %s0, 4
      %s16 = int_to_ptr.hbm [resolvable:$true] %s15
      %s17 = sshll.u32 [#allocation2], 4
      %s18 = int_to_ptr.vmem [resolvable:$true] %s17
      %20 = dma.hbm_to_vmem [thread:$0]  %s16, 16, %s18, [#allocation3]
    $region5: #{tpu_custom_call.1} parent=1 // pred_fallthru
      _
    // Predicated region
    $region6: #{tpu_custom_call.1} parent=1 // pred_check
      _
    $region7: #{tpu_custom_call.1} parent=1 // pred_check_branch
      %22 = sbr.rel (0) target = $region9
    $region8: #{tpu_custom_call.1} parent=1 // pred_region
      %24 = vsyncadd [#allocation6], 0
      %s26 = sshll.u32 %s1, 4
      %s27 = int_to_ptr.hbm [resolvable:$true] %s26
      %s28 = sshll.u32 [#allocation5], 4
      %s29 = int_to_ptr.vmem [resolvable:$true] %s28
      %31 = dma.hbm_to_vmem [thread:$0]  %s27, 16, %s29, [#allocation6]
    $region9: #{tpu_custom_call.1} parent=1 // pred_fallthru
      _
    // Predicated region
    $region10: #{tpu_custom_call.1} parent=1 // pred_check
      _
    $region11: #{tpu_custom_call.1} parent=1 // pred_check_branch
      %33 = sbr.rel (0) target = $region13
    $region12: #{tpu_custom_call.1} parent=1 // pred_region
      %35 = dma.done [#allocation3], 16
    $region13: #{tpu_custom_call.1} parent=1 // pred_fallthru
      _
    // Predicated region
    $region14: #{tpu_custom_call.1} parent=1 // pred_check
      _
    $region15: #{tpu_custom_call.1} parent=1 // pred_check_branch
      %37 = sbr.rel (0) target = $region17
    $region16: #{tpu_custom_call.1} parent=1 // pred_region
      %39 = dma.done [#allocation6], 16
    $region17: #{tpu_custom_call.1} parent=1 // pred_fallthru
      _
    %v40 = vld [vmem:[#allocation2] sm:$0x1]
    %v41 = vld [vmem:[#allocation5] sm:$0x1]
    %v42 = vsub.f32 0.0, %v41
    %v43 = vmul.f32 %v42, 1.442695
    %v44 = vpow.pop %v43
    %v45 = vmul.f32 %v44, %v40
    %v46 = vmul.f32 %v41, 0.5
    %v47 = vadd.f32 %v45, %v46
    %vm48 = vcmask 16384
    %v49 = vsel %vm48, %v47, 0.0
    %50 = vadd.xlane.f32.xlu0 %v49
    %v51 = vpop.xlane.xlu0 %50
    %v52 = vrot.slane %v51, 4
    %v53 = vadd.f32 %v51, %v52
    %v54 = vrot.slane %v53, 2
    %v55 = vadd.f32 %v53, %v54
    %v56 = vrot.slane %v55, 1
    %v57 = vadd.f32 %v55, %v56
    %s58 = vtos %v57
    %s59 = scalar_lea.smem [#allocation7], 0
    %60 = sst [smem:[%s59]] %s58
    // Predicated region
    $region18: #{tpu_custom_call.1} parent=1 // pred_check
      _
    $region19: #{tpu_custom_call.1} parent=1 // pred_check_branch
      %62 = sbr.rel (0) target = $region21
    $region20: #{tpu_custom_call.1} parent=1 // pred_region
      %64 = vsyncadd [#allocation4], 0
      %s66 = sshll.u32 %s2, 4
      %s67 = int_to_ptr.hbm [resolvable:$true] %s66
      %69 = dma.smem_to_hbm [#allocation7], 16, %s67, [#allocation4]
    $region21: #{tpu_custom_call.1} parent=1 // pred_fallthru
      _
    // Predicated region
    $region22: #{tpu_custom_call.1} parent=1 // pred_check
      _
    $region23: #{tpu_custom_call.1} parent=1 // pred_check_branch
      %71 = sbr.rel (0) target = $region25
    $region24: #{tpu_custom_call.1} parent=1 // pred_region
      %73 = dma.done [#allocation4], 16
    $region25: #{tpu_custom_call.1} parent=1 // pred_fallthru
      _
    %74 = sfence
    %75 = vsyncpa [#allocation3], 1
    %76 = vsyncpa [#allocation6], 1
    %77 = vsyncpa [#allocation4], 1

</llo_original>
